<compile_context>
chip_gen: v7x
topology: tpu7x:2x2x1
jax: 0.10.0
libtpu: 0.0.40
codegen_flags: <defaults>
</compile_context>

<pallas_src>
import jax
import jax.numpy as jnp
from jax import lax
from jax.experimental import pallas as pl
from jax.experimental.pallas import tpu as pltpu

# ---------------- model hyper-parameters (consistent with the module) --------
STATE_DIM  = 24
EMBED_DIM  = 32
NUM_HEADS  = 4            # head split cancels for seq-len 1; unused in math
NUM_LAYERS = 2
NUM_HEART  = 16
BATCH      = 8
LN_EPS     = 1e-5
FF_DIM     = 2 * EMBED_DIM
OUT_SCALE  = 10000.0      # folded into fc2 offline (see pack_params)


def _round_up(n, m):
    return ((n + m - 1) // m) * m


def _num_tensorcores():
    """Tiles-per-grid target: 2 for dual-TC / megacore parts, else 1."""
    try:
        kind = jax.devices()[0].device_kind.lower()
    except Exception:
        return 1
    if any(tag in kind for tag in ("v7", "7x", "v5p", "v4")):
        return 2
    return 1


# ------------------------ single packed parameter slab ------------------------
# One (P_ROWS, P_COLS) f32 slab; all matrix row offsets are multiples of 8.
#   rows [R_FC1 : R_FC1+S)                 : fc1 weight  (S, E)
#   per layer l, base rw = R_LAYER0 + l*ROWS_PER_LAYER:
#     rows [rw       : rw+E)               : folded attn weight  (E, E)
#     rows [rw+E     : rw+2E)              : ff linear1 weight   (E, 2E)
#     rows [rw+2E    : rw+2E+2E)           : ff linear2 weight   (2E, E)
#   rows [R_FC2 : R_FC2+E)                 : fc2 weight * 1e4    (E, H)
#   rows [R_VEC : R_VEC+16)                : one bias/gamma/beta vector per row
ROWS_PER_LAYER = EMBED_DIM + EMBED_DIM + FF_DIM          # 32 + 32 + 64 = 128
R_FC1    = 0
R_LAYER0 = STATE_DIM                                     # 24 (multiple of 8)
R_FC2    = R_LAYER0 + NUM_LAYERS * ROWS_PER_LAYER        # 280
R_VEC    = R_FC2 + EMBED_DIM                             # 312
VECS_PER_LAYER = 7
V_B1     = R_VEC                                         # fc1 bias      [:E]
V_LAYER0 = R_VEC + 1                                     # 7 rows per layer
V_B2     = V_LAYER0 + NUM_LAYERS * VECS_PER_LAYER        # 327: fc2 bias*1e4 [:H]
P_ROWS   = V_B2 + 1                                      # 328 (multiple of 8)
P_COLS   = FF_DIM                                        # 64


# --------------------------------- kernel ------------------------------------
def generator_kernel(x_ref, p_ref, out_ref):
    """relu(fc1) -> L x [folded attn + LN, FF + LN] -> scaled fc2 -> round -> int."""
    S, E, F, H, L = STATE_DIM, EMBED_DIM, FF_DIM, NUM_HEART, NUM_LAYERS

    def layernorm(h, gamma, beta):
        mu = jnp.mean(h, axis=-1, keepdims=True)
        d = h - mu
        var = jnp.mean(d * d, axis=-1, keepdims=True)     # biased var (torch LN)
        return d * lax.rsqrt(var + LN_EPS) * gamma + beta

    x = x_ref[...]                                        # (bt, S)

    b1 = p_ref[V_B1:V_B1 + 1, 0:E]                        # (1, E)
    h = jnp.dot(x, p_ref[R_FC1:R_FC1 + S, 0:E],
                preferred_element_type=jnp.float32) + b1
    h = jnp.maximum(h, 0.0)                               # relu(fc1(x))

    for l in range(L):                                    # static unroll (L=2)
        rw = R_LAYER0 + l * ROWS_PER_LAYER
        rv = V_LAYER0 + l * VECS_PER_LAYER

        w_attn = p_ref[rw:rw + E, 0:E]                    # folded Wv^T @ Wo^T
        wf1    = p_ref[rw + E:rw + 2 * E, 0:F]
        wf2    = p_ref[rw + 2 * E:rw + 2 * E + F, 0:E]
        b_attn = p_ref[rv + 0:rv + 1, 0:E]
        g1     = p_ref[rv + 1:rv + 2, 0:E]
        be1    = p_ref[rv + 2:rv + 3, 0:E]
        bf1    = p_ref[rv + 3:rv + 4, 0:F]
        bf2    = p_ref[rv + 4:rv + 5, 0:E]
        g2     = p_ref[rv + 5:rv + 6, 0:E]
        be2    = p_ref[rv + 6:rv + 7, 0:E]

        # seq-len-1 attention: softmax over one key == 1 for every head, so
        # attn_output = out_proj(v_proj(h)) = h @ W_attn + b_attn (folded offline).
        attn = jnp.dot(h, w_attn, preferred_element_type=jnp.float32) + b_attn
        h = layernorm(h + attn, g1, be1)

        f = jnp.dot(h, wf1, preferred_element_type=jnp.float32) + bf1
        f = jnp.maximum(f, 0.0)
        f = jnp.dot(f, wf2, preferred_element_type=jnp.float32) + bf2
        h = layernorm(h + f, g2, be2)

    b2 = p_ref[V_B2:V_B2 + 1, 0:H]                        # fc2 bias * 1e4
    y = jnp.dot(h, p_ref[R_FC2:R_FC2 + E, 0:H],           # fc2 weight * 1e4
                preferred_element_type=jnp.float32) + b2
    out_ref[...] = jnp.round(y).astype(jnp.int32)         # torch.round(x*1e4).int()


# --------------------------------- wrapper -----------------------------------
def generator_forward(x, p_slab, *, max_batch_tile=8192):
    B, S = x.shape
    assert S == STATE_DIM

    # Tail-only alignment pad to a multiple of 8 sublanes (no-op for typical B).
    B8 = _round_up(B, 8)
    if B8 != B:
        x = jnp.pad(x, ((0, B8 - B), (0, 0)))

    # Generation-aware tiling: 1 tile per TensorCore (grid=(1,) on v5e/v6e,
    # 2 tiles on dual-TC parts), capped at max_batch_tile rows.  Per-step VMEM
    # (~160 B/row double-buffered + 82 KiB slab) stays far under scoped limits.
    n_tiles = _num_tensorcores()
    bt = min(_round_up(max_batch_tile, 8),
             _round_up(-(-B8 // n_tiles), 8))
    grid = (pl.cdiv(B8, bt),)    # ragged last block handled by Pallas masking

    out = pl.pallas_call(
        generator_kernel,
        out_shape=jax.ShapeDtypeStruct((B8, NUM_HEART), jnp.int32),
        grid=grid,
        in_specs=[
            pl.BlockSpec((bt, S), lambda i: (i, 0)),              # x tile
            pl.BlockSpec((P_ROWS, P_COLS), lambda i: (0, 0)),     # param slab (resident)
        ],
        out_specs=pl.BlockSpec((bt, NUM_HEART), lambda i: (i, 0)),
        compiler_params=pltpu.CompilerParams(dimension_semantics=("parallel",)),
    )(x, p_slab)
    return out[:B]


# --------------------------- deterministic params ----------------------------
def init_params(key):
    """Module-faithful parameters (torch Linear weights stored transposed: (in, out))."""
    E, S, H, L, F = EMBED_DIM, STATE_DIM, NUM_HEART, NUM_LAYERS, FF_DIM
    ks = jax.random.split(key, 12)
    n = lambda k, shape, scale: (scale * jax.random.normal(k, shape)).astype(jnp.float32)

    w1t = n(ks[0], (S, E), 0.2)
    b1  = n(ks[1], (E,), 0.1)
    w2t = n(ks[2], (E, H), 0.2)
    b2  = n(ks[3], (H,), 0.1)

    # nn.MultiheadAttention: in_proj_weight (3E,E), in_proj_bias (3E,), out_proj (E,E).
    # Only the V slice reaches the output (seq len 1).
    in_proj_w = n(ks[4], (L, 3 * E, E), 0.2)
    in_proj_b = n(ks[5], (L, 3 * E), 0.1)
    wv_t = jnp.transpose(in_proj_w[:, 2 * E:3 * E, :], (0, 2, 1))   # (L, E, E)
    bv   = in_proj_b[:, 2 * E:3 * E]                                # (L, E)
    wo_t = jnp.transpose(n(ks[6], (L, E, E), 0.2), (0, 2, 1))
    bo   = n(ks[7], (L, E), 0.1)

    wf1t = jnp.transpose(n(ks[8], (L, F, E), 0.2), (0, 2, 1))       # (L, E, 2E)
    bf1  = n(ks[9], (L, F), 0.1)
    wf2t = jnp.transpose(n(ks[10], (L, E, F), 0.2), (0, 2, 1))      # (L, 2E, E)
    bf2  = n(ks[11], (L, E), 0.1)

    g1 = jnp.ones((L, E), jnp.float32); be1 = jnp.zeros((L, E), jnp.float32)
    g2 = jnp.ones((L, E), jnp.float32); be2 = jnp.zeros((L, E), jnp.float32)

    return dict(w1t=w1t, b1=b1, wv_t=wv_t, bv=bv, wo_t=wo_t, bo=bo,
                g1=g1, be1=be1, wf1t=wf1t, bf1=bf1, wf2t=wf2t, bf2=bf2,
                g2=g2, be2=be2, w2t=w2t, b2=b2)


def pack_params(p):
    """Fold attn V/out projections + the *1e4 output scale; pack into ONE slab."""
    E, H, L = EMBED_DIM, NUM_HEART, NUM_LAYERS
    # Exact fold: attn = (h @ Wv^T + bv) @ Wo^T + bo = h @ (Wv^T Wo^T) + (bv Wo^T + bo)
    w_attn = jnp.einsum('lij,ljk->lik', p['wv_t'], p['wo_t'])        # (L, E, E)
    b_attn = jnp.einsum('lj,ljk->lk', p['bv'], p['wo_t']) + p['bo']  # (L, E)
    w2t_s = p['w2t'] * OUT_SCALE                                     # fold *1e4 offline
    b2_s  = p['b2'] * OUT_SCALE

    slab = jnp.zeros((P_ROWS, P_COLS), jnp.float32)

    def put_m(s, r, m): return s.at[r:r + m.shape[0], :m.shape[1]].set(m)
    def put_v(s, r, b): return s.at[r, :b.shape[0]].set(b)

    slab = put_m(slab, R_FC1, p['w1t'])
    slab = put_v(slab, V_B1, p['b1'])
    for l in range(L):
        rw = R_LAYER0 + l * ROWS_PER_LAYER
        rv = V_LAYER0 + l * VECS_PER_LAYER
        slab = put_m(slab, rw,          w_attn[l])
        slab = put_m(slab, rw + E,      p['wf1t'][l])
        slab = put_m(slab, rw + 2 * E,  p['wf2t'][l])
        slab = put_v(slab, rv + 0, b_attn[l])
        slab = put_v(slab, rv + 1, p['g1'][l])
        slab = put_v(slab, rv + 2, p['be1'][l])
        slab = put_v(slab, rv + 3, p['bf1'][l])
        slab = put_v(slab, rv + 4, p['bf2'][l])
        slab = put_v(slab, rv + 5, p['g2'][l])
        slab = put_v(slab, rv + 6, p['be2'][l])
    slab = put_m(slab, R_FC2, w2t_s)
    slab = put_v(slab, V_B2, b2_s)
    return slab


# -------------------------- pure-JAX reference check -------------------------
def ref_forward(x, p):
    """Module-faithful (unfused) reference for the PyTorch forward."""
    def ln(h, g, b):
        mu = jnp.mean(h, axis=-1, keepdims=True)
        var = jnp.mean((h - mu) ** 2, axis=-1, keepdims=True)
        return (h - mu) / jnp.sqrt(var + LN_EPS) * g + b

    h = jax.nn.relu(x @ p["w1t"] + p["b1"])
    for l in range(NUM_LAYERS):
        v = h @ p["wv_t"][l] + p["bv"][l]
        attn = v @ p["wo_t"][l] + p["bo"][l]
        h = ln(h + attn, p["g1"][l], p["be1"][l])
        f = jax.nn.relu(h @ p["wf1t"][l] + p["bf1"][l]) @ p["wf2t"][l] + p["bf2"][l]
        h = ln(h + f, p["g2"][l], p["be2"][l])
    y = h @ p["w2t"] + p["b2"]
    return jnp.round(y * 10000.0).astype(jnp.int32)


if __name__ == "__main__":
    key = jax.random.PRNGKey(0)
    k_x, k_p = jax.random.split(key)
    x = jax.random.normal(k_x, (BATCH, STATE_DIM), dtype=jnp.float32)
    params = init_params(k_p)
    p_slab = pack_params(params)                  # fold + pack once, offline

    out = generator_forward(x, p_slab)
    out = jax.block_until_ready(out)

    ref = ref_forward(x, params)
    assert out.shape == (BATCH, NUM_HEART) and out.dtype == jnp.int32
    # +/-1 tick tolerance: MXU-vs-XLA accumulation order plus the exact algebraic
    # folds (attn fold, 1e4-into-fc2) can flip a .5 rounding edge.
    assert int(jnp.max(jnp.abs(out - ref))) <= 1, "mismatch vs pure-JAX reference"

    print("KERNEL_OK")
</pallas_src>

<mosaic_0001>
module attributes {stable_mosaic.version = 11 : i64} {
  func.func @generator_kernel(%arg0: i32, %arg1: memref<8x24xf32, #tpu.memory_space<vmem>>, %arg2: memref<328x64xf32, #tpu.memory_space<vmem>>, %arg3: memref<8x16xi32, #tpu.memory_space<vmem>>) attributes {dimension_semantics = [#tpu.dimension_semantics<parallel>], iteration_bounds = array<i64: 1>, scalar_prefetch = 0 : i64, scratch_operands = 0 : i64, tpu.core_type = #tpu.core_type<tc>, window_params = [{transform_indices = @transform_0, window_bounds = array<i64: 8, 24>}, {pipeline_mode = #tpu.pipeline_mode<synchronous>, transform_indices = @transform_1, window_bounds = array<i64: 328, 64>}, {transform_indices = @transform_2, window_bounds = array<i64: 8, 16>}]} {
    %c0 = arith.constant 0 : index
    %c0_0 = arith.constant 0 : index
    %0 = vector.load %arg1[%c0, %c0_0] : memref<8x24xf32, #tpu.memory_space<vmem>>, vector<8x24xf32>
    %c312 = arith.constant 312 : index
    %c0_1 = arith.constant 0 : index
    %1 = vector.load %arg2[%c312, %c0_1] : memref<328x64xf32, #tpu.memory_space<vmem>>, vector<1x32xf32>
    %c0_2 = arith.constant 0 : index
    %c0_3 = arith.constant 0 : index
    %2 = vector.load %arg2[%c0_2, %c0_3] : memref<328x64xf32, #tpu.memory_space<vmem>>, vector<24x32xf32>
    %cst = arith.constant dense<0.000000e+00> : vector<8x32xf32>
    %3 = tpu.matmul %0, %2, %cst {dimension_numbers = #tpu.dot_dimension_numbers<[1], [0], [0], [1], [0, 0, 1, 1], [], []>} : vector<8x24xf32>, vector<24x32xf32>, vector<8x32xf32> -> vector<8x32xf32>
    %4 = vector.broadcast %1 : vector<1x32xf32> to vector<8x32xf32>
    %5 = arith.addf %3, %4 : vector<8x32xf32>
    %cst_4 = arith.constant 0.000000e+00 : f32
    %6 = vector.broadcast %cst_4 : f32 to vector<8x32xf32>
    %7 = arith.maximumf %5, %6 : vector<8x32xf32>
    %c24 = arith.constant 24 : index
    %c0_5 = arith.constant 0 : index
    %8 = vector.load %arg2[%c24, %c0_5] : memref<328x64xf32, #tpu.memory_space<vmem>>, vector<32x32xf32>
    %c56 = arith.constant 56 : index
    %c0_6 = arith.constant 0 : index
    %9 = vector.load %arg2[%c56, %c0_6] : memref<328x64xf32, #tpu.memory_space<vmem>>, vector<32x64xf32>
    %c88 = arith.constant 88 : index
    %c0_7 = arith.constant 0 : index
    %10 = vector.load %arg2[%c88, %c0_7] : memref<328x64xf32, #tpu.memory_space<vmem>>, vector<64x32xf32>
    %c313 = arith.constant 313 : index
    %c0_8 = arith.constant 0 : index
    %11 = vector.load %arg2[%c313, %c0_8] : memref<328x64xf32, #tpu.memory_space<vmem>>, vector<1x32xf32>
    %c314 = arith.constant 314 : index
    %c0_9 = arith.constant 0 : index
    %12 = vector.load %arg2[%c314, %c0_9] : memref<328x64xf32, #tpu.memory_space<vmem>>, vector<1x32xf32>
    %c315 = arith.constant 315 : index
    %c0_10 = arith.constant 0 : index
    %13 = vector.load %arg2[%c315, %c0_10] : memref<328x64xf32, #tpu.memory_space<vmem>>, vector<1x32xf32>
    %c316 = arith.constant 316 : index
    %c0_11 = arith.constant 0 : index
    %14 = vector.load %arg2[%c316, %c0_11] : memref<328x64xf32, #tpu.memory_space<vmem>>, vector<1x64xf32>
    %c317 = arith.constant 317 : index
    %c0_12 = arith.constant 0 : index
    %15 = vector.load %arg2[%c317, %c0_12] : memref<328x64xf32, #tpu.memory_space<vmem>>, vector<1x32xf32>
    %c318 = arith.constant 318 : index
    %c0_13 = arith.constant 0 : index
    %16 = vector.load %arg2[%c318, %c0_13] : memref<328x64xf32, #tpu.memory_space<vmem>>, vector<1x32xf32>
    %c319 = arith.constant 319 : index
    %c0_14 = arith.constant 0 : index
    %17 = vector.load %arg2[%c319, %c0_14] : memref<328x64xf32, #tpu.memory_space<vmem>>, vector<1x32xf32>
    %cst_15 = arith.constant dense<0.000000e+00> : vector<8x32xf32>
    %18 = tpu.matmul %7, %8, %cst_15 {dimension_numbers = #tpu.dot_dimension_numbers<[1], [0], [0], [1], [0, 0, 1, 1], [], []>} : vector<8x32xf32>, vector<32x32xf32>, vector<8x32xf32> -> vector<8x32xf32>
    %19 = vector.broadcast %11 : vector<1x32xf32> to vector<8x32xf32>
    %20 = arith.addf %18, %19 : vector<8x32xf32>
    %21 = arith.addf %7, %20 : vector<8x32xf32>
    %cst_16 = arith.constant dense<0.000000e+00> : vector<8xf32>
    %22 = vector.multi_reduction <add>, %21, %cst_16 [1] : vector<8x32xf32> to vector<8xf32>
    %23 = vector.shape_cast %22 : vector<8xf32> to vector<8x1xf32>
    %cst_17 = arith.constant 3.200000e+01 : f32
    %24 = vector.broadcast %cst_17 : f32 to vector<8x1xf32>
    %25 = arith.divf %23, %24 : vector<8x1xf32>
    %26 = vector.broadcast %25 : vector<8x1xf32> to vector<8x32xf32>
    %27 = arith.subf %21, %26 : vector<8x32xf32>
    %28 = arith.mulf %27, %27 : vector<8x32xf32>
    %cst_18 = arith.constant dense<0.000000e+00> : vector<8xf32>
    %29 = vector.multi_reduction <add>, %28, %cst_18 [1] : vector<8x32xf32> to vector<8xf32>
    %30 = vector.shape_cast %29 : vector<8xf32> to vector<8x1xf32>
    %cst_19 = arith.constant 3.200000e+01 : f32
    %31 = vector.broadcast %cst_19 : f32 to vector<8x1xf32>
    %32 = arith.divf %30, %31 : vector<8x1xf32>
    %cst_20 = arith.constant 9.99999974E-6 : f32
    %33 = vector.broadcast %cst_20 : f32 to vector<8x1xf32>
    %34 = arith.addf %32, %33 : vector<8x1xf32>
    %35 = math.rsqrt %34 : vector<8x1xf32>
    %36 = vector.broadcast %35 : vector<8x1xf32> to vector<8x32xf32>
    %37 = arith.mulf %27, %36 : vector<8x32xf32>
    %38 = vector.broadcast %12 : vector<1x32xf32> to vector<8x32xf32>
    %39 = arith.mulf %37, %38 : vector<8x32xf32>
    %40 = vector.broadcast %13 : vector<1x32xf32> to vector<8x32xf32>
    %41 = arith.addf %39, %40 : vector<8x32xf32>
    %cst_21 = arith.constant dense<0.000000e+00> : vector<8x64xf32>
    %42 = tpu.matmul %41, %9, %cst_21 {dimension_numbers = #tpu.dot_dimension_numbers<[1], [0], [0], [1], [0, 0, 1, 1], [], []>} : vector<8x32xf32>, vector<32x64xf32>, vector<8x64xf32> -> vector<8x64xf32>
    %43 = vector.broadcast %14 : vector<1x64xf32> to vector<8x64xf32>
    %44 = arith.addf %42, %43 : vector<8x64xf32>
    %cst_22 = arith.constant 0.000000e+00 : f32
    %45 = vector.broadcast %cst_22 : f32 to vector<8x64xf32>
    %46 = arith.maximumf %44, %45 : vector<8x64xf32>
    %cst_23 = arith.constant dense<0.000000e+00> : vector<8x32xf32>
    %47 = tpu.matmul %46, %10, %cst_23 {dimension_numbers = #tpu.dot_dimension_numbers<[1], [0], [0], [1], [0, 0, 1, 1], [], []>} : vector<8x64xf32>, vector<64x32xf32>, vector<8x32xf32> -> vector<8x32xf32>
    %48 = vector.broadcast %15 : vector<1x32xf32> to vector<8x32xf32>
    %49 = arith.addf %47, %48 : vector<8x32xf32>
    %50 = arith.addf %41, %49 : vector<8x32xf32>
    %cst_24 = arith.constant dense<0.000000e+00> : vector<8xf32>
    %51 = vector.multi_reduction <add>, %50, %cst_24 [1] : vector<8x32xf32> to vector<8xf32>
    %52 = vector.shape_cast %51 : vector<8xf32> to vector<8x1xf32>
    %cst_25 = arith.constant 3.200000e+01 : f32
    %53 = vector.broadcast %cst_25 : f32 to vector<8x1xf32>
    %54 = arith.divf %52, %53 : vector<8x1xf32>
    %55 = vector.broadcast %54 : vector<8x1xf32> to vector<8x32xf32>
    %56 = arith.subf %50, %55 : vector<8x32xf32>
    %57 = arith.mulf %56, %56 : vector<8x32xf32>
    %cst_26 = arith.constant dense<0.000000e+00> : vector<8xf32>
    %58 = vector.multi_reduction <add>, %57, %cst_26 [1] : vector<8x32xf32> to vector<8xf32>
    %59 = vector.shape_cast %58 : vector<8xf32> to vector<8x1xf32>
    %cst_27 = arith.constant 3.200000e+01 : f32
    %60 = vector.broadcast %cst_27 : f32 to vector<8x1xf32>
    %61 = arith.divf %59, %60 : vector<8x1xf32>
    %cst_28 = arith.constant 9.99999974E-6 : f32
    %62 = vector.broadcast %cst_28 : f32 to vector<8x1xf32>
    %63 = arith.addf %61, %62 : vector<8x1xf32>
    %64 = math.rsqrt %63 : vector<8x1xf32>
    %65 = vector.broadcast %64 : vector<8x1xf32> to vector<8x32xf32>
    %66 = arith.mulf %56, %65 : vector<8x32xf32>
    %67 = vector.broadcast %16 : vector<1x32xf32> to vector<8x32xf32>
    %68 = arith.mulf %66, %67 : vector<8x32xf32>
    %69 = vector.broadcast %17 : vector<1x32xf32> to vector<8x32xf32>
    %70 = arith.addf %68, %69 : vector<8x32xf32>
    %c152 = arith.constant 152 : index
    %c0_29 = arith.constant 0 : index
    %71 = vector.load %arg2[%c152, %c0_29] : memref<328x64xf32, #tpu.memory_space<vmem>>, vector<32x32xf32>
    %c184 = arith.constant 184 : index
    %c0_30 = arith.constant 0 : index
    %72 = vector.load %arg2[%c184, %c0_30] : memref<328x64xf32, #tpu.memory_space<vmem>>, vector<32x64xf32>
    %c216 = arith.constant 216 : index
    %c0_31 = arith.constant 0 : index
    %73 = vector.load %arg2[%c216, %c0_31] : memref<328x64xf32, #tpu.memory_space<vmem>>, vector<64x32xf32>
    %c320 = arith.constant 320 : index
    %c0_32 = arith.constant 0 : index
    %74 = vector.load %arg2[%c320, %c0_32] : memref<328x64xf32, #tpu.memory_space<vmem>>, vector<1x32xf32>
    %c321 = arith.constant 321 : index
    %c0_33 = arith.constant 0 : index
    %75 = vector.load %arg2[%c321, %c0_33] : memref<328x64xf32, #tpu.memory_space<vmem>>, vector<1x32xf32>
    %c322 = arith.constant 322 : index
    %c0_34 = arith.constant 0 : index
    %76 = vector.load %arg2[%c322, %c0_34] : memref<328x64xf32, #tpu.memory_space<vmem>>, vector<1x32xf32>
    %c323 = arith.constant 323 : index
    %c0_35 = arith.constant 0 : index
    %77 = vector.load %arg2[%c323, %c0_35] : memref<328x64xf32, #tpu.memory_space<vmem>>, vector<1x64xf32>
    %c324 = arith.constant 324 : index
    %c0_36 = arith.constant 0 : index
    %78 = vector.load %arg2[%c324, %c0_36] : memref<328x64xf32, #tpu.memory_space<vmem>>, vector<1x32xf32>
    %c325 = arith.constant 325 : index
    %c0_37 = arith.constant 0 : index
    %79 = vector.load %arg2[%c325, %c0_37] : memref<328x64xf32, #tpu.memory_space<vmem>>, vector<1x32xf32>
    %c326 = arith.constant 326 : index
    %c0_38 = arith.constant 0 : index
    %80 = vector.load %arg2[%c326, %c0_38] : memref<328x64xf32, #tpu.memory_space<vmem>>, vector<1x32xf32>
    %cst_39 = arith.constant dense<0.000000e+00> : vector<8x32xf32>
    %81 = tpu.matmul %70, %71, %cst_39 {dimension_numbers = #tpu.dot_dimension_numbers<[1], [0], [0], [1], [0, 0, 1, 1], [], []>} : vector<8x32xf32>, vector<32x32xf32>, vector<8x32xf32> -> vector<8x32xf32>
    %82 = vector.broadcast %74 : vector<1x32xf32> to vector<8x32xf32>
    %83 = arith.addf %81, %82 : vector<8x32xf32>
    %84 = arith.addf %70, %83 : vector<8x32xf32>
    %cst_40 = arith.constant dense<0.000000e+00> : vector<8xf32>
    %85 = vector.multi_reduction <add>, %84, %cst_40 [1] : vector<8x32xf32> to vector<8xf32>
    %86 = vector.shape_cast %85 : vector<8xf32> to vector<8x1xf32>
    %cst_41 = arith.constant 3.200000e+01 : f32
    %87 = vector.broadcast %cst_41 : f32 to vector<8x1xf32>
    %88 = arith.divf %86, %87 : vector<8x1xf32>
    %89 = vector.broadcast %88 : vector<8x1xf32> to vector<8x32xf32>
    %90 = arith.subf %84, %89 : vector<8x32xf32>
    %91 = arith.mulf %90, %90 : vector<8x32xf32>
    %cst_42 = arith.constant dense<0.000000e+00> : vector<8xf32>
    %92 = vector.multi_reduction <add>, %91, %cst_42 [1] : vector<8x32xf32> to vector<8xf32>
    %93 = vector.shape_cast %92 : vector<8xf32> to vector<8x1xf32>
    %cst_43 = arith.constant 3.200000e+01 : f32
    %94 = vector.broadcast %cst_43 : f32 to vector<8x1xf32>
    %95 = arith.divf %93, %94 : vector<8x1xf32>
    %cst_44 = arith.constant 9.99999974E-6 : f32
    %96 = vector.broadcast %cst_44 : f32 to vector<8x1xf32>
    %97 = arith.addf %95, %96 : vector<8x1xf32>
    %98 = math.rsqrt %97 : vector<8x1xf32>
    %99 = vector.broadcast %98 : vector<8x1xf32> to vector<8x32xf32>
    %100 = arith.mulf %90, %99 : vector<8x32xf32>
    %101 = vector.broadcast %75 : vector<1x32xf32> to vector<8x32xf32>
    %102 = arith.mulf %100, %101 : vector<8x32xf32>
    %103 = vector.broadcast %76 : vector<1x32xf32> to vector<8x32xf32>
    %104 = arith.addf %102, %103 : vector<8x32xf32>
    %cst_45 = arith.constant dense<0.000000e+00> : vector<8x64xf32>
    %105 = tpu.matmul %104, %72, %cst_45 {dimension_numbers = #tpu.dot_dimension_numbers<[1], [0], [0], [1], [0, 0, 1, 1], [], []>} : vector<8x32xf32>, vector<32x64xf32>, vector<8x64xf32> -> vector<8x64xf32>
    %106 = vector.broadcast %77 : vector<1x64xf32> to vector<8x64xf32>
    %107 = arith.addf %105, %106 : vector<8x64xf32>
    %cst_46 = arith.constant 0.000000e+00 : f32
    %108 = vector.broadcast %cst_46 : f32 to vector<8x64xf32>
    %109 = arith.maximumf %107, %108 : vector<8x64xf32>
    %cst_47 = arith.constant dense<0.000000e+00> : vector<8x32xf32>
    %110 = tpu.matmul %109, %73, %cst_47 {dimension_numbers = #tpu.dot_dimension_numbers<[1], [0], [0], [1], [0, 0, 1, 1], [], []>} : vector<8x64xf32>, vector<64x32xf32>, vector<8x32xf32> -> vector<8x32xf32>
    %111 = vector.broadcast %78 : vector<1x32xf32> to vector<8x32xf32>
    %112 = arith.addf %110, %111 : vector<8x32xf32>
    %113 = arith.addf %104, %112 : vector<8x32xf32>
    %cst_48 = arith.constant dense<0.000000e+00> : vector<8xf32>
    %114 = vector.multi_reduction <add>, %113, %cst_48 [1] : vector<8x32xf32> to vector<8xf32>
    %115 = vector.shape_cast %114 : vector<8xf32> to vector<8x1xf32>
    %cst_49 = arith.constant 3.200000e+01 : f32
    %116 = vector.broadcast %cst_49 : f32 to vector<8x1xf32>
    %117 = arith.divf %115, %116 : vector<8x1xf32>
    %118 = vector.broadcast %117 : vector<8x1xf32> to vector<8x32xf32>
    %119 = arith.subf %113, %118 : vector<8x32xf32>
    %120 = arith.mulf %119, %119 : vector<8x32xf32>
    %cst_50 = arith.constant dense<0.000000e+00> : vector<8xf32>
    %121 = vector.multi_reduction <add>, %120, %cst_50 [1] : vector<8x32xf32> to vector<8xf32>
    %122 = vector.shape_cast %121 : vector<8xf32> to vector<8x1xf32>
    %cst_51 = arith.constant 3.200000e+01 : f32
    %123 = vector.broadcast %cst_51 : f32 to vector<8x1xf32>
    %124 = arith.divf %122, %123 : vector<8x1xf32>
    %cst_52 = arith.constant 9.99999974E-6 : f32
    %125 = vector.broadcast %cst_52 : f32 to vector<8x1xf32>
    %126 = arith.addf %124, %125 : vector<8x1xf32>
    %127 = math.rsqrt %126 : vector<8x1xf32>
    %128 = vector.broadcast %127 : vector<8x1xf32> to vector<8x32xf32>
    %129 = arith.mulf %119, %128 : vector<8x32xf32>
    %130 = vector.broadcast %79 : vector<1x32xf32> to vector<8x32xf32>
    %131 = arith.mulf %129, %130 : vector<8x32xf32>
    %132 = vector.broadcast %80 : vector<1x32xf32> to vector<8x32xf32>
    %133 = arith.addf %131, %132 : vector<8x32xf32>
    %c327 = arith.constant 327 : index
    %c0_53 = arith.constant 0 : index
    %134 = vector.load %arg2[%c327, %c0_53] : memref<328x64xf32, #tpu.memory_space<vmem>>, vector<1x16xf32>
    %c280 = arith.constant 280 : index
    %c0_54 = arith.constant 0 : index
    %135 = vector.load %arg2[%c280, %c0_54] : memref<328x64xf32, #tpu.memory_space<vmem>>, vector<32x16xf32>
    %cst_55 = arith.constant dense<0.000000e+00> : vector<8x16xf32>
    %136 = tpu.matmul %133, %135, %cst_55 {dimension_numbers = #tpu.dot_dimension_numbers<[1], [0], [0], [1], [0, 0, 1, 1], [], []>} : vector<8x32xf32>, vector<32x16xf32>, vector<8x16xf32> -> vector<8x16xf32>
    %137 = vector.broadcast %134 : vector<1x16xf32> to vector<8x16xf32>
    %138 = arith.addf %136, %137 : vector<8x16xf32>
    %139 = math.roundeven %138 : vector<8x16xf32>
    %140 = arith.fptosi %139 : vector<8x16xf32> to vector<8x16xi32>
    %c0_56 = arith.constant 0 : index
    %c0_57 = arith.constant 0 : index
    %141 = vector.load %arg3[%c0_56, %c0_57] : memref<8x16xi32, #tpu.memory_space<vmem>>, vector<8x16xi32>
    tpu.vector_store %arg3[%c0_56, %c0_57], %140 {strides = array<i32>} : memref<8x16xi32, #tpu.memory_space<vmem>>, vector<8x16xi32>,
    return
  }
  func.func @transform_0(%arg0: i32) -> (i32, i32) {
    %c0_i32 = arith.constant 0 : i32
    %c0_i32_0 = arith.constant 0 : i32
    return %arg0, %c0_i32 : i32, i32
  }
  func.func @transform_1(%arg0: i32) -> (i32, i32) {
    %c0_i32 = arith.constant 0 : i32
    %c0_i32_0 = arith.constant 0 : i32
    %c0_i32_1 = arith.constant 0 : i32
    return %c0_i32, %c0_i32_0 : i32, i32
  }
  func.func @transform_2(%arg0: i32) -> (i32, i32) {
    %c0_i32 = arith.constant 0 : i32
    %c0_i32_0 = arith.constant 0 : i32
    return %arg0, %c0_i32 : i32, i32
  }
}

</mosaic_0001>

<llo_original>
// kernel: tpu_custom_call.1
$region0: #{tpu_custom_call.1}
  #allocation0 [shape = 'u32[]', space=smem, size = 0x4, offset = 0x4, fixed_abs, tag = 'smem constant byte address 0x4 - core index']
  #allocation1 [shape = 'u32[144,128]{1,0:T(1,128)}', space=vmem, size = 0x12000, scoped, tag = 'internal scratch']
  %s0 = inlined_call_operand.vmem [shape: f32[8,24], index: 0, kind: input, shape index: {}]
  %s1 = inlined_call_operand.vmem [shape: f32[328,64], index: 1, kind: input, shape index: {}]
  %s2 = inlined_call_operand.hbm [shape: s32[8,16], index: 2, kind: output, shape index: {}]
  %s3 = sld [smem:[#allocation0]]
  $region18: #{tpu_custom_call.1} parent=0
    _
  %s5 = ssub.s32 1, %s3
  %s6 = scalar_select 0, %s5, %s3
  $region1: #{tpu_custom_call.1} parent=0
    #allocation2 [shape = 'u8[4096]{0}', space=vmem, size = 0x1000, scoped, tag = 'output window, operand 0, single buffered']
    #allocation3 [shape = 's32[1]{0}', space=sflag, size = 0x4, scoped, tag = 'scoped memory for tpu_custom_call.1']
    %7 = vsyncpa [#allocation3], 0
    // Predicated region
    $region2: #{tpu_custom_call.1} parent=1 // pred_check
      _
    $region3: #{tpu_custom_call.1} parent=1 // pred_check_branch
      %9 = sbr.rel (0) target = $region5
    $region4: #{tpu_custom_call.1} parent=1 // pred_region
      _
    $region5: #{tpu_custom_call.1} parent=1 // pred_fallthru
      _
    // Predicated region
    $region6: #{tpu_custom_call.1} parent=1 // pred_check
      _
    $region7: #{tpu_custom_call.1} parent=1 // pred_check_branch
      %11 = sbr.rel (0) target = $region9
    $region8: #{tpu_custom_call.1} parent=1 // pred_region
      _
    $region9: #{tpu_custom_call.1} parent=1 // pred_fallthru
      _
    %v12 = vld [vmem:[%s0] sm:$0xff]
    %v13 = vld [vmem:[%s1 + $0x138] sm:$0x1]
    %v14 = vld [vmem:[%s1] sm:$0xff]
    %v15 = vld [vmem:[%s1 + $0x8] sm:$0xff]
    %v16 = vld [vmem:[%s1 + $0x10] sm:$0xff]
    %v17 = vlaneseq
    %v18 = vshrl.u32 %v17, 7
    %v19 = vsub.s32 0, %v18
    %v20 = vrot.slane %v13, %v19
    %vm21 = vcmask 195584
    %v23 = vsel %vm21, %v12, 0
    %25 = vmatprep.subr.mxu0 0.0
    %26 = vmatpush1.msra.mxu0 %v14
    %27 = vmatprep.subr.mxu0 0.0
    %28 = vmatpush1.msra.mxu0 %v15
    %29 = vmatprep.subr.mxu0 0.0
    %30 = vmatpush1.msra.mxu0 %v16
    %31 = vmatprep.subr.mxu0 0.0
    %32 = vmatpush1.msra.mxu0 0.0
    %33 = vmatprep.subr.mxu0 0.0
    %34 = vmatpush1.msra.mxu0 0.0
    %35 = vmatprep.subr.mxu0 0.0
    %36 = vmatpush1.msra.mxu0 0.0
    %37 = vmatprep.subr.mxu0 0.0
    %38 = vmatpush1.msra.mxu0 0.0
    %39 = vmatprep.subr.mxu0 0.0
    %40 = vmatpush1.msra.mxu0 0.0
    %41 = vmatprep.subr.mxu0 0.0
    %42 = vmatpush1.msra.mxu0 0.0
    %43 = vmatprep.subr.mxu0 0.0
    %44 = vmatpush1.msra.mxu0 0.0
    %45 = vmatprep.subr.mxu0 0.0
    %46 = vmatpush1.msra.mxu0 0.0
    %47 = vmatprep.subr.mxu0 0.0
    %48 = vmatpush1.msra.mxu0 0.0
    %49 = vmatprep.subr.mxu0 0.0
    %50 = vmatpush1.msra.mxu0 0.0
    %51 = vmatprep.subr.mxu0 0.0
    %52 = vmatpush1.msra.mxu0 0.0
    %53 = vmatprep.subr.mxu0 0.0
    %54 = vmatpush1.msra.mxu0 0.0
    %55 = vmatprep.subr.mxu0 0.0
    %56 = vmatpush1.msra.mxu0 0.0
    %57 = vmatprep.subr.mxu0 0.0
    %58 = vmatpush1.msra.mxu0 0.0
    %59 = vmatprep.subr.mxu0 0.0
    %60 = vmatpush1.msra.mxu0 0.0
    %61 = vmatprep.subr.mxu0 0.0
    %62 = vmatpush1.msra.mxu0 0.0
    %63 = vmatprep.subr.mxu0 0.0
    %64 = vmatpush1.msra.mxu0 0.0
    %65 = vmatprep.subr.mxu0 0.0
    %66 = vmatpush1.msra.mxu0 0.0
    %67 = vmatprep.subr.mxu0 0.0
    %68 = vmatpush1.msra.mxu0 0.0
    %69 = vmatprep.subr.mxu0 0.0
    %70 = vmatpush1.msra.mxu0 0.0
    %71 = vmatprep.subr.mxu0 0.0
    %72 = vmatpush1.msra.mxu0 0.0
    %73 = vmatprep.subr.mxu0 0.0
    %74 = vmatpush1.msra.mxu0 0.0
    %75 = vmatprep.subr.mxu0 0.0
    %76 = vmatpush1.msra.mxu0 0.0
    %77 = vmatprep.subr.mxu0 0.0
    %78 = vmatpush1.msra.mxu0 0.0
    %79 = vmatprep.subr.mxu0 0.0
    %80 = vmatpush1.msra.mxu0 0.0
    %81 = vmatprep.subr.mxu0 0.0
    %82 = vmatpush1.msra.mxu0 0.0
    %83 = vmatprep.subr.mxu0 0.0
    %84 = vmatpush1.msra.mxu0 0.0
    %85 = vmatprep.subr.mxu0 0.0
    %86 = vmatpush1.msra.mxu0 0.0
    %87 = vmatprep.subr.mxu0 0.0
    %88 = vmatpush1.msra.mxu0 0.0
    %89 = vmatprep.mubr.f32.mxu0 0.0
    %90 = vmatmul.mubr.f32.gmra.mrb[0].mxu0 %v23
    %v91 = vpop.f32.mrb[0].mxu0
    %v92 = vadd.f32 %v20, %v91
    %v93 = vpop.f32.mrb[0].mxu0
    %94 = vdwg.mxu0
    %v95 = vmax.f32 %v92, 0.0
    %v96 = vld [vmem:[%s1 + $0x18] sm:$0xff]
    %v97 = vld [vmem:[%s1 + $0x20] sm:$0xff]
    %v98 = vld [vmem:[%s1 + $0x28] sm:$0xff]
    %v99 = vld [vmem:[%s1 + $0x30] sm:$0xff]
    %v100 = vld [vmem:[%s1 + $0x38] sm:$0xff]
    %v101 = vld [vmem:[%s1 + $0x40] sm:$0xff]
    %v102 = vld [vmem:[%s1 + $0x48] sm:$0xff]
    %v103 = vld [vmem:[%s1 + $0x50] sm:$0xff]
    %v104 = vld [vmem:[%s1 + $0x58] sm:$0xff]
    %v105 = vld [vmem:[%s1 + $0x60] sm:$0xff]
    %v106 = vld [vmem:[%s1 + $0x68] sm:$0xff]
    %v107 = vld [vmem:[%s1 + $0x70] sm:$0xff]
    %v108 = vld [vmem:[%s1 + $0x78] sm:$0xff]
    %v109 = vld [vmem:[%s1 + $0x80] sm:$0xff]
    %v110 = vld [vmem:[%s1 + $0x88] sm:$0xff]
    %v111 = vld [vmem:[%s1 + $0x90] sm:$0xff]
    %v112 = vld [vmem:[%s1 + $0x139] sm:$0x1]
    %v113 = vld [vmem:[%s1 + $0x13a] sm:$0x1]
    %v114 = vld [vmem:[%s1 + $0x13b] sm:$0x1]
    %v115 = vld [vmem:[%s1 + $0x13c] sm:$0x1]
    %v116 = vld [vmem:[%s1 + $0x13d] sm:$0x1]
    %v117 = vld [vmem:[%s1 + $0x13e] sm:$0x1]
    %v118 = vld [vmem:[%s1 + $0x13f] sm:$0x1]
    %v119 = vlaneseq
    %v120 = vshrl.u32 %v119, 7
    %v121 = vsub.s32 0, %v120
    %v122 = vrot.slane %v112, %v121
    %vm123 = vcmask 261120
    %v125 = vsel %vm123, %v95, 0
    %127 = vmatprep.subr.mxu0 0.0
    %128 = vmatpush1.msra.mxu0 %v96
    %129 = vmatprep.subr.mxu0 0.0
    %130 = vmatpush1.msra.mxu0 %v97
    %131 = vmatprep.subr.mxu0 0.0
    %132 = vmatpush1.msra.mxu0 %v98
    %133 = vmatprep.subr.mxu0 0.0
    %134 = vmatpush1.msra.mxu0 %v99
    %135 = vmatprep.subr.mxu0 0.0
    %136 = vmatpush1.msra.mxu0 0.0
    %137 = vmatprep.subr.mxu0 0.0
    %138 = vmatpush1.msra.mxu0 0.0
    %139 = vmatprep.subr.mxu0 0.0
    %140 = vmatpush1.msra.mxu0 0.0
    %141 = vmatprep.subr.mxu0 0.0
    %142 = vmatpush1.msra.mxu0 0.0
    %143 = vmatprep.subr.mxu0 0.0
    %144 = vmatpush1.msra.mxu0 0.0
    %145 = vmatprep.subr.mxu0 0.0
    %146 = vmatpush1.msra.mxu0 0.0
    %147 = vmatprep.subr.mxu0 0.0
    %148 = vmatpush1.msra.mxu0 0.0
    %149 = vmatprep.subr.mxu0 0.0
    %150 = vmatpush1.msra.mxu0 0.0
    %151 = vmatprep.subr.mxu0 0.0
    %152 = vmatpush1.msra.mxu0 0.0
    %153 = vmatprep.subr.mxu0 0.0
    %154 = vmatpush1.msra.mxu0 0.0
    %155 = vmatprep.subr.mxu0 0.0
    %156 = vmatpush1.msra.mxu0 0.0
    %157 = vmatprep.subr.mxu0 0.0
    %158 = vmatpush1.msra.mxu0 0.0
    %159 = vmatprep.subr.mxu0 0.0
    %160 = vmatpush1.msra.mxu0 0.0
    %161 = vmatprep.subr.mxu0 0.0
    %162 = vmatpush1.msra.mxu0 0.0
    %163 = vmatprep.subr.mxu0 0.0
    %164 = vmatpush1.msra.mxu0 0.0
    %165 = vmatprep.subr.mxu0 0.0
    %166 = vmatpush1.msra.mxu0 0.0
    %167 = vmatprep.subr.mxu0 0.0
    %168 = vmatpush1.msra.mxu0 0.0
    %169 = vmatprep.subr.mxu0 0.0
    %170 = vmatpush1.msra.mxu0 0.0
    %171 = vmatprep.subr.mxu0 0.0
    %172 = vmatpush1.msra.mxu0 0.0
    %173 = vmatprep.subr.mxu0 0.0
    %174 = vmatpush1.msra.mxu0 0.0
    %175 = vmatprep.subr.mxu0 0.0
    %176 = vmatpush1.msra.mxu0 0.0
    %177 = vmatprep.subr.mxu0 0.0
    %178 = vmatpush1.msra.mxu0 0.0
    %179 = vmatprep.subr.mxu0 0.0
    %180 = vmatpush1.msra.mxu0 0.0
    %181 = vmatprep.subr.mxu0 0.0
    %182 = vmatpush1.msra.mxu0 0.0
    %183 = vmatprep.subr.mxu0 0.0
    %184 = vmatpush1.msra.mxu0 0.0
    %185 = vmatprep.subr.mxu0 0.0
    %186 = vmatpush1.msra.mxu0 0.0
    %187 = vmatprep.subr.mxu0 0.0
    %188 = vmatpush1.msra.mxu0 0.0
    %189 = vmatprep.subr.mxu0 0.0
    %190 = vmatpush1.msra.mxu0 0.0
    %191 = vmatprep.mubr.f32.mxu0 0.0
    %192 = vmatmul.mubr.f32.gmra.mrb[0].mxu0 %v125
    %v193 = vpop.f32.mrb[0].mxu0
    %v194 = vadd.f32 %v122, %v193
    %v195 = vpop.f32.mrb[0].mxu0
    %196 = vdwg.mxu0
    %v197 = vadd.f32 %v95, %v194
    %v198 = vsel %vm123, %v197, 0.0
    %199 = vadd.xlane.f32.xlu0 %v198
    %v200 = vpop.xlane.xlu0 %199
    %v201 = vrcp.pop 32.0
    %v202 = vmul.f32 %v200, %v201
    %v203 = vsub.f32 %v197, %v202
    %v204 = vmul.f32 %v203, %v203
    %v205 = vsel %vm123, %v204, 0.0
    %206 = vadd.xlane.f32.xlu0 %v205
    %v207 = vpop.xlane.xlu0 %206
    %v208 = vmul.f32 %v207, %v201
    %v209 = vadd.f32 %v208, 1e-05
    %v210 = vrsqrt.pop %v209
    %v211 = vmul.f32 %v203, %v210
    %v212 = vlaneseq
    %v213 = vshrl.u32 %v212, 7
    %v214 = vsub.s32 0, %v213
    %v215 = vrot.slane %v113, %v214
    %v216 = vmul.f32 %v211, %v215
    %v217 = vlaneseq
    %v218 = vshrl.u32 %v217, 7
    %v219 = vsub.s32 0, %v218
    %v220 = vrot.slane %v114, %v219
    %v221 = vadd.f32 %v216, %v220
    %v222 = vlaneseq
    %v223 = vshrl.u32 %v222, 7
    %v224 = vsub.s32 0, %v223
    %v225 = vrot.slane %v115, %v224
    %v227 = vsel %vm123, %v221, 0
    %229 = vmatprep.subr.mxu0 0.0
    %230 = vmatpush1.msra.mxu0 %v100
    %231 = vmatprep.subr.mxu0 0.0
    %232 = vmatpush1.msra.mxu0 %v101
    %233 = vmatprep.subr.mxu0 0.0
    %234 = vmatpush1.msra.mxu0 %v102
    %235 = vmatprep.subr.mxu0 0.0
    %236 = vmatpush1.msra.mxu0 %v103
    %237 = vmatprep.subr.mxu0 0.0
    %238 = vmatpush1.msra.mxu0 0.0
    %239 = vmatprep.subr.mxu0 0.0
    %240 = vmatpush1.msra.mxu0 0.0
    %241 = vmatprep.subr.mxu0 0.0
    %242 = vmatpush1.msra.mxu0 0.0
    %243 = vmatprep.subr.mxu0 0.0
    %244 = vmatpush1.msra.mxu0 0.0
    %245 = vmatprep.subr.mxu0 0.0
    %246 = vmatpush1.msra.mxu0 0.0
    %247 = vmatprep.subr.mxu0 0.0
    %248 = vmatpush1.msra.mxu0 0.0
    %249 = vmatprep.subr.mxu0 0.0
    %250 = vmatpush1.msra.mxu0 0.0
    %251 = vmatprep.subr.mxu0 0.0
    %252 = vmatpush1.msra.mxu0 0.0
    %253 = vmatprep.subr.mxu0 0.0
    %254 = vmatpush1.msra.mxu0 0.0
    %255 = vmatprep.subr.mxu0 0.0
    %256 = vmatpush1.msra.mxu0 0.0
    %257 = vmatprep.subr.mxu0 0.0
    %258 = vmatpush1.msra.mxu0 0.0
    %259 = vmatprep.subr.mxu0 0.0
    %260 = vmatpush1.msra.mxu0 0.0
    %261 = vmatprep.subr.mxu0 0.0
    %262 = vmatpush1.msra.mxu0 0.0
    %263 = vmatprep.subr.mxu0 0.0
    %264 = vmatpush1.msra.mxu0 0.0
    %265 = vmatprep.subr.mxu0 0.0
    %266 = vmatpush1.msra.mxu0 0.0
    %267 = vmatprep.subr.mxu0 0.0
    %268 = vmatpush1.msra.mxu0 0.0
    %269 = vmatprep.subr.mxu0 0.0
    %270 = vmatpush1.msra.mxu0 0.0
    %271 = vmatprep.subr.mxu0 0.0
    %272 = vmatpush1.msra.mxu0 0.0
    %273 = vmatprep.subr.mxu0 0.0
    %274 = vmatpush1.msra.mxu0 0.0
    %275 = vmatprep.subr.mxu0 0.0
    %276 = vmatpush1.msra.mxu0 0.0
    %277 = vmatprep.subr.mxu0 0.0
    %278 = vmatpush1.msra.mxu0 0.0
    %279 = vmatprep.subr.mxu0 0.0
    %280 = vmatpush1.msra.mxu0 0.0
    %281 = vmatprep.subr.mxu0 0.0
    %282 = vmatpush1.msra.mxu0 0.0
    %283 = vmatprep.subr.mxu0 0.0
    %284 = vmatpush1.msra.mxu0 0.0
    %285 = vmatprep.subr.mxu0 0.0
    %286 = vmatpush1.msra.mxu0 0.0
    %287 = vmatprep.subr.mxu0 0.0
    %288 = vmatpush1.msra.mxu0 0.0
    %289 = vmatprep.subr.mxu0 0.0
    %290 = vmatpush1.msra.mxu0 0.0
    %291 = vmatprep.subr.mxu0 0.0
    %292 = vmatpush1.msra.mxu0 0.0
    %293 = vmatprep.mubr.f32.mxu0 0.0
    %294 = vmatmul.mubr.f32.gmra.mrb[0].mxu0 %v227
    %v295 = vpop.f32.mrb[0].mxu0
    %v296 = vadd.f32 %v225, %v295
    %v297 = vpop.f32.mrb[0].mxu0
    %298 = vdwg.mxu0
    %v299 = vmax.f32 %v296, 0.0
    %v300 = vlaneseq
    %v301 = vshrl.u32 %v300, 7
    %v302 = vsub.s32 0, %v301
    %v303 = vrot.slane %v116, %v302
    %vm304 = vcmask 523264
    %v306 = vsel %vm304, %v299, 0
    %308 = vmatprep.subr.mxu0 0.0
    %309 = vmatpush1.msra.mxu0 %v104
    %310 = vmatprep.subr.mxu0 0.0
    %311 = vmatpush1.msra.mxu0 %v105
    %312 = vmatprep.subr.mxu0 0.0
    %313 = vmatpush1.msra.mxu0 %v106
    %314 = vmatprep.subr.mxu0 0.0
    %315 = vmatpush1.msra.mxu0 %v107
    %316 = vmatprep.subr.mxu0 0.0
    %317 = vmatpush1.msra.mxu0 %v108
    %318 = vmatprep.subr.mxu0 0.0
    %319 = vmatpush1.msra.mxu0 %v109
    %320 = vmatprep.subr.mxu0 0.0
    %321 = vmatpush1.msra.mxu0 %v110
    %322 = vmatprep.subr.mxu0 0.0
    %323 = vmatpush1.msra.mxu0 %v111
    %324 = vmatprep.subr.mxu0 0.0
    %325 = vmatpush1.msra.mxu0 0.0
    %326 = vmatprep.subr.mxu0 0.0
    %327 = vmatpush1.msra.mxu0 0.0
    %328 = vmatprep.subr.mxu0 0.0
    %329 = vmatpush1.msra.mxu0 0.0
    %330 = vmatprep.subr.mxu0 0.0
    %331 = vmatpush1.msra.mxu0 0.0
    %332 = vmatprep.subr.mxu0 0.0
    %333 = vmatpush1.msra.mxu0 0.0
    %334 = vmatprep.subr.mxu0 0.0
    %335 = vmatpush1.msra.mxu0 0.0
    %336 = vmatprep.subr.mxu0 0.0
    %337 = vmatpush1.msra.mxu0 0.0
    %338 = vmatprep.subr.mxu0 0.0
    %339 = vmatpush1.msra.mxu0 0.0
    %340 = vmatprep.subr.mxu0 0.0
    %341 = vmatpush1.msra.mxu0 0.0
    %342 = vmatprep.subr.mxu0 0.0
    %343 = vmatpush1.msra.mxu0 0.0
    %344 = vmatprep.subr.mxu0 0.0
    %345 = vmatpush1.msra.mxu0 0.0
    %346 = vmatprep.subr.mxu0 0.0
    %347 = vmatpush1.msra.mxu0 0.0
    %348 = vmatprep.subr.mxu0 0.0
    %349 = vmatpush1.msra.mxu0 0.0
    %350 = vmatprep.subr.mxu0 0.0
    %351 = vmatpush1.msra.mxu0 0.0
    %352 = vmatprep.subr.mxu0 0.0
    %353 = vmatpush1.msra.mxu0 0.0
    %354 = vmatprep.subr.mxu0 0.0
    %355 = vmatpush1.msra.mxu0 0.0
    %356 = vmatprep.subr.mxu0 0.0
    %357 = vmatpush1.msra.mxu0 0.0
    %358 = vmatprep.subr.mxu0 0.0
    %359 = vmatpush1.msra.mxu0 0.0
    %360 = vmatprep.subr.mxu0 0.0
    %361 = vmatpush1.msra.mxu0 0.0
    %362 = vmatprep.subr.mxu0 0.0
    %363 = vmatpush1.msra.mxu0 0.0
    %364 = vmatprep.subr.mxu0 0.0
    %365 = vmatpush1.msra.mxu0 0.0
    %366 = vmatprep.subr.mxu0 0.0
    %367 = vmatpush1.msra.mxu0 0.0
    %368 = vmatprep.subr.mxu0 0.0
    %369 = vmatpush1.msra.mxu0 0.0
    %370 = vmatprep.subr.mxu0 0.0
    %371 = vmatpush1.msra.mxu0 0.0
    %372 = vmatprep.mubr.f32.mxu0 0.0
    %373 = vmatmul.mubr.f32.gmra.mrb[0].mxu0 %v306
    %v374 = vpop.f32.mrb[0].mxu0
    %v375 = vadd.f32 %v303, %v374
    %v376 = vpop.f32.mrb[0].mxu0
    %377 = vdwg.mxu0
    %v378 = vadd.f32 %v221, %v375
    %v379 = vsel %vm123, %v378, 0.0
    %380 = vadd.xlane.f32.xlu0 %v379
    %v381 = vpop.xlane.xlu0 %380
    %v382 = vmul.f32 %v381, %v201
    %v383 = vsub.f32 %v378, %v382
    %v384 = vmul.f32 %v383, %v383
    %v385 = vsel %vm123, %v384, 0.0
    %386 = vadd.xlane.f32.xlu0 %v385
    %v387 = vpop.xlane.xlu0 %386
    %v388 = vmul.f32 %v387, %v201
    %v389 = vadd.f32 %v388, 1e-05
    %v390 = vrsqrt.pop %v389
    %v391 = vmul.f32 %v383, %v390
    %v392 = vlaneseq
    %v393 = vshrl.u32 %v392, 7
    %v394 = vsub.s32 0, %v393
    %v395 = vrot.slane %v117, %v394
    %v396 = vmul.f32 %v391, %v395
    %v397 = vlaneseq
    %v398 = vshrl.u32 %v397, 7
    %v399 = vsub.s32 0, %v398
    %v400 = vrot.slane %v118, %v399
    %v401 = vadd.f32 %v396, %v400
    %v402 = vld [vmem:[%s1 + $0x98] sm:$0xff]
    %v403 = vld [vmem:[%s1 + $0xa0] sm:$0xff]
    %v404 = vld [vmem:[%s1 + $0xa8] sm:$0xff]
    %v405 = vld [vmem:[%s1 + $0xb0] sm:$0xff]
    %v406 = vld [vmem:[%s1 + $0xb8] sm:$0xff]
    %v407 = vld [vmem:[%s1 + $0xc0] sm:$0xff]
    %v408 = vld [vmem:[%s1 + $0xc8] sm:$0xff]
    %v409 = vld [vmem:[%s1 + $0xd0] sm:$0xff]
    %v410 = vld [vmem:[%s1 + $0xd8] sm:$0xff]
    %v411 = vld [vmem:[%s1 + $0xe0] sm:$0xff]
    %v412 = vld [vmem:[%s1 + $0xe8] sm:$0xff]
    %v413 = vld [vmem:[%s1 + $0xf0] sm:$0xff]
    %v414 = vld [vmem:[%s1 + $0xf8] sm:$0xff]
    %v415 = vld [vmem:[%s1 + $0x100] sm:$0xff]
    %v416 = vld [vmem:[%s1 + $0x108] sm:$0xff]
    %v417 = vld [vmem:[%s1 + $0x110] sm:$0xff]
    %v418 = vld [vmem:[%s1 + $0x140] sm:$0x1]
    %v419 = vld [vmem:[%s1 + $0x141] sm:$0x1]
    %v420 = vld [vmem:[%s1 + $0x142] sm:$0x1]
    %v421 = vld [vmem:[%s1 + $0x143] sm:$0x1]
    %v422 = vld [vmem:[%s1 + $0x144] sm:$0x1]
    %v423 = vld [vmem:[%s1 + $0x145] sm:$0x1]
    %v424 = vld [vmem:[%s1 + $0x146] sm:$0x1]
    %v425 = vlaneseq
    %v426 = vshrl.u32 %v425, 7
    %v427 = vsub.s32 0, %v426
    %v428 = vrot.slane %v418, %v427
    %v430 = vsel %vm123, %v401, 0
    %432 = vmatprep.subr.mxu0 0.0
    %433 = vmatpush1.msra.mxu0 %v402
    %434 = vmatprep.subr.mxu0 0.0
    %435 = vmatpush1.msra.mxu0 %v403
    %436 = vmatprep.subr.mxu0 0.0
    %437 = vmatpush1.msra.mxu0 %v404
    %438 = vmatprep.subr.mxu0 0.0
    %439 = vmatpush1.msra.mxu0 %v405
    %440 = vmatprep.subr.mxu0 0.0
    %441 = vmatpush1.msra.mxu0 0.0
    %442 = vmatprep.subr.mxu0 0.0
    %443 = vmatpush1.msra.mxu0 0.0
    %444 = vmatprep.subr.mxu0 0.0
    %445 = vmatpush1.msra.mxu0 0.0
    %446 = vmatprep.subr.mxu0 0.0
    %447 = vmatpush1.msra.mxu0 0.0
    %448 = vmatprep.subr.mxu0 0.0
    %449 = vmatpush1.msra.mxu0 0.0
    %450 = vmatprep.subr.mxu0 0.0
    %451 = vmatpush1.msra.mxu0 0.0
    %452 = vmatprep.subr.mxu0 0.0
    %453 = vmatpush1.msra.mxu0 0.0
    %454 = vmatprep.subr.mxu0 0.0
    %455 = vmatpush1.msra.mxu0 0.0
    %456 = vmatprep.subr.mxu0 0.0
    %457 = vmatpush1.msra.mxu0 0.0
    %458 = vmatprep.subr.mxu0 0.0
    %459 = vmatpush1.msra.mxu0 0.0
    %460 = vmatprep.subr.mxu0 0.0
    %461 = vmatpush1.msra.mxu0 0.0
    %462 = vmatprep.subr.mxu0 0.0
    %463 = vmatpush1.msra.mxu0 0.0
    %464 = vmatprep.subr.mxu0 0.0
    %465 = vmatpush1.msra.mxu0 0.0
    %466 = vmatprep.subr.mxu0 0.0
    %467 = vmatpush1.msra.mxu0 0.0
    %468 = vmatprep.subr.mxu0 0.0
    %469 = vmatpush1.msra.mxu0 0.0
    %470 = vmatprep.subr.mxu0 0.0
    %471 = vmatpush1.msra.mxu0 0.0
    %472 = vmatprep.subr.mxu0 0.0
    %473 = vmatpush1.msra.mxu0 0.0
    %474 = vmatprep.subr.mxu0 0.0
    %475 = vmatpush1.msra.mxu0 0.0
    %476 = vmatprep.subr.mxu0 0.0
    %477 = vmatpush1.msra.mxu0 0.0
    %478 = vmatprep.subr.mxu0 0.0
    %479 = vmatpush1.msra.mxu0 0.0
    %480 = vmatprep.subr.mxu0 0.0
    %481 = vmatpush1.msra.mxu0 0.0
    %482 = vmatprep.subr.mxu0 0.0
    %483 = vmatpush1.msra.mxu0 0.0
    %484 = vmatprep.subr.mxu0 0.0
    %485 = vmatpush1.msra.mxu0 0.0
    %486 = vmatprep.subr.mxu0 0.0
    %487 = vmatpush1.msra.mxu0 0.0
    %488 = vmatprep.subr.mxu0 0.0
    %489 = vmatpush1.msra.mxu0 0.0
    %490 = vmatprep.subr.mxu0 0.0
    %491 = vmatpush1.msra.mxu0 0.0
    %492 = vmatprep.subr.mxu0 0.0
    %493 = vmatpush1.msra.mxu0 0.0
    %494 = vmatprep.subr.mxu0 0.0
    %495 = vmatpush1.msra.mxu0 0.0
    %496 = vmatprep.mubr.f32.mxu0 0.0
    %497 = vmatmul.mubr.f32.gmra.mrb[0].mxu0 %v430
    %v498 = vpop.f32.mrb[0].mxu0
    %v499 = vadd.f32 %v428, %v498
    %v500 = vpop.f32.mrb[0].mxu0
    %501 = vdwg.mxu0
    %v502 = vadd.f32 %v401, %v499
    %v503 = vsel %vm123, %v502, 0.0
    %504 = vadd.xlane.f32.xlu0 %v503
    %v505 = vpop.xlane.xlu0 %504
    %v506 = vmul.f32 %v505, %v201
    %v507 = vsub.f32 %v502, %v506
    %v508 = vmul.f32 %v507, %v507
    %v509 = vsel %vm123, %v508, 0.0
    %510 = vadd.xlane.f32.xlu0 %v509
    %v511 = vpop.xlane.xlu0 %510
    %v512 = vmul.f32 %v511, %v201
    %v513 = vadd.f32 %v512, 1e-05
    %v514 = vrsqrt.pop %v513
    %v515 = vmul.f32 %v507, %v514
    %v516 = vlaneseq
    %v517 = vshrl.u32 %v516, 7
    %v518 = vsub.s32 0, %v517
    %v519 = vrot.slane %v419, %v518
    %v520 = vmul.f32 %v515, %v519
    %v521 = vlaneseq
    %v522 = vshrl.u32 %v521, 7
    %v523 = vsub.s32 0, %v522
    %v524 = vrot.slane %v420, %v523
    %v525 = vadd.f32 %v520, %v524
    %v526 = vlaneseq
    %v527 = vshrl.u32 %v526, 7
    %v528 = vsub.s32 0, %v527
    %v529 = vrot.slane %v421, %v528
    %v531 = vsel %vm123, %v525, 0
    %533 = vmatprep.subr.mxu0 0.0
    %534 = vmatpush1.msra.mxu0 %v406
    %535 = vmatprep.subr.mxu0 0.0
    %536 = vmatpush1.msra.mxu0 %v407
    %537 = vmatprep.subr.mxu0 0.0
    %538 = vmatpush1.msra.mxu0 %v408
    %539 = vmatprep.subr.mxu0 0.0
    %540 = vmatpush1.msra.mxu0 %v409
    %541 = vmatprep.subr.mxu0 0.0
    %542 = vmatpush1.msra.mxu0 0.0
    %543 = vmatprep.subr.mxu0 0.0
    %544 = vmatpush1.msra.mxu0 0.0
    %545 = vmatprep.subr.mxu0 0.0
    %546 = vmatpush1.msra.mxu0 0.0
    %547 = vmatprep.subr.mxu0 0.0
    %548 = vmatpush1.msra.mxu0 0.0
    %549 = vmatprep.subr.mxu0 0.0
    %550 = vmatpush1.msra.mxu0 0.0
    %551 = vmatprep.subr.mxu0 0.0
    %552 = vmatpush1.msra.mxu0 0.0
    %553 = vmatprep.subr.mxu0 0.0
    %554 = vmatpush1.msra.mxu0 0.0
    %555 = vmatprep.subr.mxu0 0.0
    %556 = vmatpush1.msra.mxu0 0.0
    %557 = vmatprep.subr.mxu0 0.0
    %558 = vmatpush1.msra.mxu0 0.0
    %559 = vmatprep.subr.mxu0 0.0
    %560 = vmatpush1.msra.mxu0 0.0
    %561 = vmatprep.subr.mxu0 0.0
    %562 = vmatpush1.msra.mxu0 0.0
    %563 = vmatprep.subr.mxu0 0.0
    %564 = vmatpush1.msra.mxu0 0.0
    %565 = vmatprep.subr.mxu0 0.0
    %566 = vmatpush1.msra.mxu0 0.0
    %567 = vmatprep.subr.mxu0 0.0
    %568 = vmatpush1.msra.mxu0 0.0
    %569 = vmatprep.subr.mxu0 0.0
    %570 = vmatpush1.msra.mxu0 0.0
    %571 = vmatprep.subr.mxu0 0.0
    %572 = vmatpush1.msra.mxu0 0.0
    %573 = vmatprep.subr.mxu0 0.0
    %574 = vmatpush1.msra.mxu0 0.0
    %575 = vmatprep.subr.mxu0 0.0
    %576 = vmatpush1.msra.mxu0 0.0
    %577 = vmatprep.subr.mxu0 0.0
    %578 = vmatpush1.msra.mxu0 0.0
    %579 = vmatprep.subr.mxu0 0.0
    %580 = vmatpush1.msra.mxu0 0.0
    %581 = vmatprep.subr.mxu0 0.0
    %582 = vmatpush1.msra.mxu0 0.0
    %583 = vmatprep.subr.mxu0 0.0
    %584 = vmatpush1.msra.mxu0 0.0
    %585 = vmatprep.subr.mxu0 0.0
    %586 = vmatpush1.msra.mxu0 0.0
    %587 = vmatprep.subr.mxu0 0.0
    %588 = vmatpush1.msra.mxu0 0.0
    %589 = vmatprep.subr.mxu0 0.0
    %590 = vmatpush1.msra.mxu0 0.0
    %591 = vmatprep.subr.mxu0 0.0
    %592 = vmatpush1.msra.mxu0 0.0
    %593 = vmatprep.subr.mxu0 0.0
    %594 = vmatpush1.msra.mxu0 0.0
    %595 = vmatprep.subr.mxu0 0.0
    %596 = vmatpush1.msra.mxu0 0.0
    %597 = vmatprep.mubr.f32.mxu0 0.0
    %598 = vmatmul.mubr.f32.gmra.mrb[0].mxu0 %v531
    %v599 = vpop.f32.mrb[0].mxu0
    %v600 = vadd.f32 %v529, %v599
    %v601 = vpop.f32.mrb[0].mxu0
    %602 = vdwg.mxu0
    %v603 = vmax.f32 %v600, 0.0
    %v604 = vlaneseq
    %v605 = vshrl.u32 %v604, 7
    %v606 = vsub.s32 0, %v605
    %v607 = vrot.slane %v422, %v606
    %v609 = vsel %vm304, %v603, 0
    %611 = vmatprep.subr.mxu0 0.0
    %612 = vmatpush1.msra.mxu0 %v410
    %613 = vmatprep.subr.mxu0 0.0
    %614 = vmatpush1.msra.mxu0 %v411
    %615 = vmatprep.subr.mxu0 0.0
    %616 = vmatpush1.msra.mxu0 %v412
    %617 = vmatprep.subr.mxu0 0.0
    %618 = vmatpush1.msra.mxu0 %v413
    %619 = vmatprep.subr.mxu0 0.0
    %620 = vmatpush1.msra.mxu0 %v414
    %621 = vmatprep.subr.mxu0 0.0
    %622 = vmatpush1.msra.mxu0 %v415
    %623 = vmatprep.subr.mxu0 0.0
    %624 = vmatpush1.msra.mxu0 %v416
    %625 = vmatprep.subr.mxu0 0.0
    %626 = vmatpush1.msra.mxu0 %v417
    %627 = vmatprep.subr.mxu0 0.0
    %628 = vmatpush1.msra.mxu0 0.0
    %629 = vmatprep.subr.mxu0 0.0
    %630 = vmatpush1.msra.mxu0 0.0
    %631 = vmatprep.subr.mxu0 0.0
    %632 = vmatpush1.msra.mxu0 0.0
    %633 = vmatprep.subr.mxu0 0.0
    %634 = vmatpush1.msra.mxu0 0.0
    %635 = vmatprep.subr.mxu0 0.0
    %636 = vmatpush1.msra.mxu0 0.0
    %637 = vmatprep.subr.mxu0 0.0
    %638 = vmatpush1.msra.mxu0 0.0
    %639 = vmatprep.subr.mxu0 0.0
    %640 = vmatpush1.msra.mxu0 0.0
    %641 = vmatprep.subr.mxu0 0.0
    %642 = vmatpush1.msra.mxu0 0.0
    %643 = vmatprep.subr.mxu0 0.0
    %644 = vmatpush1.msra.mxu0 0.0
    %645 = vmatprep.subr.mxu0 0.0
    %646 = vmatpush1.msra.mxu0 0.0
    %647 = vmatprep.subr.mxu0 0.0
    %648 = vmatpush1.msra.mxu0 0.0
    %649 = vmatprep.subr.mxu0 0.0
    %650 = vmatpush1.msra.mxu0 0.0
    %651 = vmatprep.subr.mxu0 0.0
    %652 = vmatpush1.msra.mxu0 0.0
    %653 = vmatprep.subr.mxu0 0.0
    %654 = vmatpush1.msra.mxu0 0.0
    %655 = vmatprep.subr.mxu0 0.0
    %656 = vmatpush1.msra.mxu0 0.0
    %657 = vmatprep.subr.mxu0 0.0
    %658 = vmatpush1.msra.mxu0 0.0
    %659 = vmatprep.subr.mxu0 0.0
    %660 = vmatpush1.msra.mxu0 0.0
    %661 = vmatprep.subr.mxu0 0.0
    %662 = vmatpush1.msra.mxu0 0.0
    %663 = vmatprep.subr.mxu0 0.0
    %664 = vmatpush1.msra.mxu0 0.0
    %665 = vmatprep.subr.mxu0 0.0
    %666 = vmatpush1.msra.mxu0 0.0
    %667 = vmatprep.subr.mxu0 0.0
    %668 = vmatpush1.msra.mxu0 0.0
    %669 = vmatprep.subr.mxu0 0.0
    %670 = vmatpush1.msra.mxu0 0.0
    %671 = vmatprep.subr.mxu0 0.0
    %672 = vmatpush1.msra.mxu0 0.0
    %673 = vmatprep.subr.mxu0 0.0
    %674 = vmatpush1.msra.mxu0 0.0
    %675 = vmatprep.mubr.f32.mxu0 0.0
    %676 = vmatmul.mubr.f32.gmra.mrb[0].mxu0 %v609
    %v677 = vpop.f32.mrb[0].mxu0
    %v678 = vadd.f32 %v607, %v677
    %v679 = vpop.f32.mrb[0].mxu0
    %680 = vdwg.mxu0
    %v681 = vadd.f32 %v525, %v678
    %v682 = vsel %vm123, %v681, 0.0
    %683 = vadd.xlane.f32.xlu0 %v682
    %v684 = vpop.xlane.xlu0 %683
    %v685 = vmul.f32 %v684, %v201
    %v686 = vsub.f32 %v681, %v685
    %v687 = vmul.f32 %v686, %v686
    %v688 = vsel %vm123, %v687, 0.0
    %689 = vadd.xlane.f32.xlu0 %v688
    %v690 = vpop.xlane.xlu0 %689
    %v691 = vmul.f32 %v690, %v201
    %v692 = vadd.f32 %v691, 1e-05
    %v693 = vrsqrt.pop %v692
    %v694 = vmul.f32 %v686, %v693
    %v695 = vlaneseq
    %v696 = vshrl.u32 %v695, 7
    %v697 = vsub.s32 0, %v696
    %v698 = vrot.slane %v423, %v697
    %v699 = vmul.f32 %v694, %v698
    %v700 = vlaneseq
    %v701 = vshrl.u32 %v700, 7
    %v702 = vsub.s32 0, %v701
    %v703 = vrot.slane %v424, %v702
    %v704 = vadd.f32 %v699, %v703
    %v705 = vld [vmem:[%s1 + $0x147] sm:$0x1]
    %v706 = vld [vmem:[%s1 + $0x118] sm:$0xff]
    %v707 = vld [vmem:[%s1 + $0x120] sm:$0xff]
    %v708 = vld [vmem:[%s1 + $0x128] sm:$0xff]
    %v709 = vld [vmem:[%s1 + $0x130] sm:$0xff]
    %v710 = vlaneseq
    %v711 = vshrl.u32 %v710, 7
    %v712 = vsub.s32 0, %v711
    %v713 = vrot.slane %v705, %v712
    %v715 = vsel %vm123, %v704, 0
    %717 = vmatprep.subr.mxu0 0.0
    %718 = vmatpush1.msra.mxu0 %v706
    %719 = vmatprep.subr.mxu0 0.0
    %720 = vmatpush1.msra.mxu0 %v707
    %721 = vmatprep.subr.mxu0 0.0
    %722 = vmatpush1.msra.mxu0 %v708
    %723 = vmatprep.subr.mxu0 0.0
    %724 = vmatpush1.msra.mxu0 %v709
    %725 = vmatprep.subr.mxu0 0.0
    %726 = vmatpush1.msra.mxu0 0.0
    %727 = vmatprep.subr.mxu0 0.0
    %728 = vmatpush1.msra.mxu0 0.0
    %729 = vmatprep.subr.mxu0 0.0
    %730 = vmatpush1.msra.mxu0 0.0
    %731 = vmatprep.subr.mxu0 0.0
    %732 = vmatpush1.msra.mxu0 0.0
    %733 = vmatprep.subr.mxu0 0.0
    %734 = vmatpush1.msra.mxu0 0.0
    %735 = vmatprep.subr.mxu0 0.0
    %736 = vmatpush1.msra.mxu0 0.0
    %737 = vmatprep.subr.mxu0 0.0
    %738 = vmatpush1.msra.mxu0 0.0
    %739 = vmatprep.subr.mxu0 0.0
    %740 = vmatpush1.msra.mxu0 0.0
    %741 = vmatprep.subr.mxu0 0.0
    %742 = vmatpush1.msra.mxu0 0.0
    %743 = vmatprep.subr.mxu0 0.0
    %744 = vmatpush1.msra.mxu0 0.0
    %745 = vmatprep.subr.mxu0 0.0
    %746 = vmatpush1.msra.mxu0 0.0
    %747 = vmatprep.subr.mxu0 0.0
    %748 = vmatpush1.msra.mxu0 0.0
    %749 = vmatprep.subr.mxu0 0.0
    %750 = vmatpush1.msra.mxu0 0.0
    %751 = vmatprep.subr.mxu0 0.0
    %752 = vmatpush1.msra.mxu0 0.0
    %753 = vmatprep.subr.mxu0 0.0
    %754 = vmatpush1.msra.mxu0 0.0
    %755 = vmatprep.subr.mxu0 0.0
    %756 = vmatpush1.msra.mxu0 0.0
    %757 = vmatprep.subr.mxu0 0.0
    %758 = vmatpush1.msra.mxu0 0.0
    %759 = vmatprep.subr.mxu0 0.0
    %760 = vmatpush1.msra.mxu0 0.0
    %761 = vmatprep.subr.mxu0 0.0
    %762 = vmatpush1.msra.mxu0 0.0
    %763 = vmatprep.subr.mxu0 0.0
    %764 = vmatpush1.msra.mxu0 0.0
    %765 = vmatprep.subr.mxu0 0.0
    %766 = vmatpush1.msra.mxu0 0.0
    %767 = vmatprep.subr.mxu0 0.0
    %768 = vmatpush1.msra.mxu0 0.0
    %769 = vmatprep.subr.mxu0 0.0
    %770 = vmatpush1.msra.mxu0 0.0
    %771 = vmatprep.subr.mxu0 0.0
    %772 = vmatpush1.msra.mxu0 0.0
    %773 = vmatprep.subr.mxu0 0.0
    %774 = vmatpush1.msra.mxu0 0.0
    %775 = vmatprep.subr.mxu0 0.0
    %776 = vmatpush1.msra.mxu0 0.0
    %777 = vmatprep.subr.mxu0 0.0
    %778 = vmatpush1.msra.mxu0 0.0
    %779 = vmatprep.subr.mxu0 0.0
    %780 = vmatpush1.msra.mxu0 0.0
    %781 = vmatprep.mubr.f32.mxu0 0.0
    %782 = vmatmul.mubr.f32.gmra.mrb[0].mxu0 %v715
    %v783 = vpop.f32.mrb[0].mxu0
    %v784 = vadd.f32 %v713, %v783
    %v785 = vpop.f32.mrb[0].mxu0
    %786 = vdwg.mxu0
    %v787 = vcvt.f32.s32.ties.to.even %v784
    %vm788 = vcmask 130048
    %789 = vst.msk [vmem:[#allocation2] sm:$0xff] %vm788, %v787
    // Predicated region
    $region10: #{tpu_custom_call.1} parent=1 // pred_check
      _
    $region11: #{tpu_custom_call.1} parent=1 // pred_check_branch
      %791 = sbr.rel (0) target = $region13
    $region12: #{tpu_custom_call.1} parent=1 // pred_region
      %s793 = ssub.s32 128, 128
      %794 = vsyncadd [#allocation3], %s793
      %s796 = sshll.u32 [#allocation2], 4
      %s797 = int_to_ptr.vmem [resolvable:$true] %s796
      %799 = dma.vmem_to_hbm [thread:$0]  %s797, 128, %s2, [#allocation3]
    $region13: #{tpu_custom_call.1} parent=1 // pred_fallthru
      _
    // Predicated region
    $region14: #{tpu_custom_call.1} parent=1 // pred_check
      _
    $region15: #{tpu_custom_call.1} parent=1 // pred_check_branch
      %801 = sbr.rel (0) target = $region17
    $region16: #{tpu_custom_call.1} parent=1 // pred_region
      %802 = dma.done [#allocation3], 128
    $region17: #{tpu_custom_call.1} parent=1 // pred_fallthru
      _
    %803 = vsyncpa [#allocation3], 1

</llo_original>
